<compile_context>
chip_gen: v6e
topology: v6e:2x2x1
jax: 0.10.0
libtpu: 0.0.40
codegen_flags: <defaults>
</compile_context>

<pallas_src>
import jax
import jax.numpy as jnp
from jax.experimental import pallas as pl
from jax.experimental.pallas import tpu as pltpu


def _round_up(n, m):
    return ((n + m - 1) // m) * m


def emitter_kernel(x_ref, w1_ref, b1_ref, w2_ref, b2_ref, w3_ref, b3_ref,
                   ps_ref):
    x = x_ref[...]                                   # (tile, in_dim)
    wdt = w1_ref.dtype                               # f32 or bf16 operands

    # lin_z_to_hidden + ReLU (f32 MXU accumulation, f32 bias/ReLU)
    h1 = jnp.dot(x, w1_ref[...], preferred_element_type=jnp.float32) + b1_ref[...]
    h1 = jnp.maximum(h1, 0.0).astype(wdt)

    # lin_hidden_to_hidden + ReLU
    h2 = jnp.dot(h1, w2_ref[...], preferred_element_type=jnp.float32) + b2_ref[...]
    h2 = jnp.maximum(h2, 0.0).astype(wdt)

    # lin_hidden_to_output + sigmoid (f32), one lane-dense store
    logits = jnp.dot(h2, w3_ref[...], preferred_element_type=jnp.float32) + b3_ref[...]
    ps_ref[...] = jax.nn.sigmoid(logits).astype(ps_ref.dtype)


def emitter_forward(x2d, params, output_dim, *, row_tile=256):
    """x2d: (N, input_dim) with N = batch * time (flattened).

    params: weights pre-transposed to (in, out) and zero-padded to lane-dense
    widths; biases as (1, out_padded) in f32.  Returns (N, output_dim) f32.
    """
    w1, b1, w2, b2, w3, b3 = params
    N, in_dim = x2d.shape
    hid_p = w1.shape[1]
    out_p = w3.shape[1]

    # bf16 operand path: cast x once in the wrapper (halves HBM read traffic).
    x2d = x2d.astype(w1.dtype)

    # Large tiles amortize the ~0.35 us per-grid-step overhead; when N fits in
    # one tile the grid collapses to (1,).
    tile = N if N <= row_tile else row_tile
    grid = (pl.cdiv(N, tile),)
    # NOTE: if N % tile != 0, the tail block reads padded VMEM rows; they flow
    # through the GEMMs/sigmoid but their out-of-bounds writes are dropped.
    # Harmless here (no cross-step accumulation / aliasing).

    # Weights/biases: constant block index -> loaded once, VMEM-resident
    # across every grid step.
    const = lambda shape: pl.BlockSpec(shape, lambda i: (0, 0))

    ps = pl.pallas_call(
        emitter_kernel,
        out_shape=jax.ShapeDtypeStruct((N, out_p), jnp.float32),
        grid=grid,
        in_specs=[
            pl.BlockSpec((tile, in_dim), lambda i: (i, 0)),   # row tiles of x
            const((in_dim, hid_p)),
            const((1, hid_p)),
            const((hid_p, hid_p)),
            const((1, hid_p)),
            const((hid_p, out_p)),
            const((1, out_p)),
        ],
        out_specs=pl.BlockSpec((tile, out_p), lambda i: (i, 0)),
        compiler_params=pltpu.CompilerParams(
            dimension_semantics=("parallel",)),   # shards across v7x's 2 TCs
    )(x2d, w1, b1, w2, b2, w3, b3)

    # Drop the zero-padded output columns (sigmoid(0)=0.5 lives only there).
    return ps[:, :output_dim]


def init_params(key, output_dim, input_dim, hidden_dim, *,
                weight_dtype=jnp.float32, lane=128):
    """nn.Linear-style init U(-1/sqrt(fan_in), 1/sqrt(fan_in)).

    Done ONCE here so the per-call path does no layout work:
      * weights transposed to (in, out), biases reshaped to (1, out)
      * hidden_dim / output_dim zero-padded up to a multiple of 128 lanes
        (mathematically inert: zero columns + ReLU(0)=0, zero rows hit zero
        activations, padded output columns are sliced off in the wrapper)
      * weights optionally cast to bf16 (biases stay f32).
    """
    ks = jax.random.split(key, 6)

    def lin(kw, kb, out_f, in_f):
        bound = 1.0 / jnp.sqrt(in_f)
        w = jax.random.uniform(kw, (out_f, in_f), jnp.float32, -bound, bound)
        b = jax.random.uniform(kb, (out_f,), jnp.float32, -bound, bound)
        return w.T, b[None, :]                    # (in, out), (1, out)

    w1, b1 = lin(ks[0], ks[1], hidden_dim, input_dim)
    w2, b2 = lin(ks[2], ks[3], hidden_dim, hidden_dim)
    w3, b3 = lin(ks[4], ks[5], output_dim, hidden_dim)

    hid_p = _round_up(hidden_dim, lane)
    out_p = _round_up(output_dim, lane)

    def pad_to(a, shape):
        return jnp.pad(a, [(0, t - s) for s, t in zip(a.shape, shape)])

    w1 = pad_to(w1, (input_dim, hid_p)).astype(weight_dtype)
    b1 = pad_to(b1, (1, hid_p))
    w2 = pad_to(w2, (hid_p, hid_p)).astype(weight_dtype)
    b2 = pad_to(b2, (1, hid_p))
    w3 = pad_to(w3, (hid_p, out_p)).astype(weight_dtype)
    b3 = pad_to(b3, (1, out_p))
    return w1, b1, w2, b2, w3, b3


if __name__ == "__main__":
    # Small shapes consistent with the DMM emitter (piano-roll output).
    input_dim, hidden_dim, output_dim = 32, 64, 88
    B, T = 8, 16                                   # batch x timesteps

    key = jax.random.PRNGKey(0)
    k_x, k_p = jax.random.split(key)
    inputs = jax.random.normal(k_x, (B, T, input_dim), jnp.float32)

    # Fuse the per-timestep loop: flatten (B, T) -> one gridded pallas_call.
    x2d = inputs.reshape(B * T, input_dim)

    # ---- f32 path (bit-faithful to the PyTorch module) -------------------
    params = init_params(k_p, output_dim, input_dim, hidden_dim,
                         weight_dtype=jnp.float32)
    ps = emitter_forward(x2d, params, output_dim, row_tile=256)
    ps = ps.reshape(B, T, output_dim)
    jax.block_until_ready(ps)

    # Plain-JAX reference on the padded params (padding is inert).
    w1, b1, w2, b2, w3, b3 = params
    h1 = jnp.maximum(x2d @ w1 + b1[0], 0.0)
    h2 = jnp.maximum(h1 @ w2 + b2[0], 0.0)
    ps_ref = jax.nn.sigmoid(h2 @ w3 + b3[0])[:, :output_dim]
    ps_ref = ps_ref.reshape(B, T, output_dim)
    assert jnp.allclose(ps, ps_ref, atol=1e-5), "emitter f32 output mismatch"

    # ---- bf16 operand path (HBM/MXU savings for large batch*time) --------
    params_bf16 = init_params(k_p, output_dim, input_dim, hidden_dim,
                              weight_dtype=jnp.bfloat16)
    ps_bf16 = emitter_forward(x2d, params_bf16, output_dim, row_tile=256)
    ps_bf16 = ps_bf16.reshape(B, T, output_dim)
    jax.block_until_ready(ps_bf16)
    assert jnp.allclose(ps_bf16, ps_ref, atol=5e-2), "emitter bf16 mismatch"

    print("KERNEL_OK")
</pallas_src>

<mosaic_0001>
module attributes {stable_mosaic.version = 11 : i64} {
  func.func @emitter_kernel(%arg0: i32, %arg1: memref<128x32xf32, #tpu.memory_space<vmem>>, %arg2: memref<32x128xf32, #tpu.memory_space<vmem>>, %arg3: memref<1x128xf32, #tpu.memory_space<vmem>>, %arg4: memref<128x128xf32, #tpu.memory_space<vmem>>, %arg5: memref<1x128xf32, #tpu.memory_space<vmem>>, %arg6: memref<128x128xf32, #tpu.memory_space<vmem>>, %arg7: memref<1x128xf32, #tpu.memory_space<vmem>>, %arg8: memref<128x128xf32, #tpu.memory_space<vmem>>) attributes {dimension_semantics = [#tpu.dimension_semantics<parallel>], iteration_bounds = array<i64: 1>, scalar_prefetch = 0 : i64, scratch_operands = 0 : i64, tpu.core_type = #tpu.core_type<tc>, window_params = [{transform_indices = @transform_0, window_bounds = array<i64: 128, 32>}, {pipeline_mode = #tpu.pipeline_mode<synchronous>, transform_indices = @transform_1, window_bounds = array<i64: 32, 128>}, {pipeline_mode = #tpu.pipeline_mode<synchronous>, transform_indices = @transform_2, window_bounds = array<i64: 1, 128>}, {pipeline_mode = #tpu.pipeline_mode<synchronous>, transform_indices = @transform_3, window_bounds = array<i64: 128, 128>}, {pipeline_mode = #tpu.pipeline_mode<synchronous>, transform_indices = @transform_4, window_bounds = array<i64: 1, 128>}, {pipeline_mode = #tpu.pipeline_mode<synchronous>, transform_indices = @transform_5, window_bounds = array<i64: 128, 128>}, {pipeline_mode = #tpu.pipeline_mode<synchronous>, transform_indices = @transform_6, window_bounds = array<i64: 1, 128>}, {transform_indices = @transform_7, window_bounds = array<i64: 128, 128>}]} {
    %c0 = arith.constant 0 : index
    %c0_0 = arith.constant 0 : index
    %0 = vector.load %arg1[%c0, %c0_0] : memref<128x32xf32, #tpu.memory_space<vmem>>, vector<128x32xf32>
    %c0_1 = arith.constant 0 : index
    %c0_2 = arith.constant 0 : index
    %1 = vector.load %arg2[%c0_1, %c0_2] : memref<32x128xf32, #tpu.memory_space<vmem>>, vector<32x128xf32>
    %cst = arith.constant dense<0.000000e+00> : vector<128x128xf32>
    %2 = tpu.matmul %0, %1, %cst {dimension_numbers = #tpu.dot_dimension_numbers<[1], [0], [0], [1], [0, 0, 1, 1], [], []>} : vector<128x32xf32>, vector<32x128xf32>, vector<128x128xf32> -> vector<128x128xf32>
    %c0_3 = arith.constant 0 : index
    %c0_4 = arith.constant 0 : index
    %3 = vector.load %arg3[%c0_3, %c0_4] : memref<1x128xf32, #tpu.memory_space<vmem>>, vector<1x128xf32>
    %4 = vector.broadcast %3 : vector<1x128xf32> to vector<128x128xf32>
    %5 = arith.addf %2, %4 : vector<128x128xf32>
    %cst_5 = arith.constant 0.000000e+00 : f32
    %6 = vector.broadcast %cst_5 : f32 to vector<128x128xf32>
    %7 = arith.maximumf %5, %6 : vector<128x128xf32>
    %c0_6 = arith.constant 0 : index
    %c0_7 = arith.constant 0 : index
    %8 = vector.load %arg4[%c0_6, %c0_7] : memref<128x128xf32, #tpu.memory_space<vmem>>, vector<128x128xf32>
    %cst_8 = arith.constant dense<0.000000e+00> : vector<128x128xf32>
    %9 = tpu.matmul %7, %8, %cst_8 {dimension_numbers = #tpu.dot_dimension_numbers<[1], [0], [0], [1], [0, 0, 1, 1], [], []>} : vector<128x128xf32>, vector<128x128xf32>, vector<128x128xf32> -> vector<128x128xf32>
    %c0_9 = arith.constant 0 : index
    %c0_10 = arith.constant 0 : index
    %10 = vector.load %arg5[%c0_9, %c0_10] : memref<1x128xf32, #tpu.memory_space<vmem>>, vector<1x128xf32>
    %11 = vector.broadcast %10 : vector<1x128xf32> to vector<128x128xf32>
    %12 = arith.addf %9, %11 : vector<128x128xf32>
    %cst_11 = arith.constant 0.000000e+00 : f32
    %13 = vector.broadcast %cst_11 : f32 to vector<128x128xf32>
    %14 = arith.maximumf %12, %13 : vector<128x128xf32>
    %c0_12 = arith.constant 0 : index
    %c0_13 = arith.constant 0 : index
    %15 = vector.load %arg6[%c0_12, %c0_13] : memref<128x128xf32, #tpu.memory_space<vmem>>, vector<128x128xf32>
    %cst_14 = arith.constant dense<0.000000e+00> : vector<128x128xf32>
    %16 = tpu.matmul %14, %15, %cst_14 {dimension_numbers = #tpu.dot_dimension_numbers<[1], [0], [0], [1], [0, 0, 1, 1], [], []>} : vector<128x128xf32>, vector<128x128xf32>, vector<128x128xf32> -> vector<128x128xf32>
    %c0_15 = arith.constant 0 : index
    %c0_16 = arith.constant 0 : index
    %17 = vector.load %arg7[%c0_15, %c0_16] : memref<1x128xf32, #tpu.memory_space<vmem>>, vector<1x128xf32>
    %18 = vector.broadcast %17 : vector<1x128xf32> to vector<128x128xf32>
    %19 = arith.addf %16, %18 : vector<128x128xf32>
    %20 = arith.negf %19 : vector<128x128xf32>
    %21 = math.exp %20 : vector<128x128xf32>
    %cst_17 = arith.constant 1.000000e+00 : f32
    %22 = vector.broadcast %cst_17 : f32 to vector<128x128xf32>
    %23 = arith.addf %22, %21 : vector<128x128xf32>
    %24 = arith.divf %22, %23 : vector<128x128xf32>
    %c0_18 = arith.constant 0 : index
    %c0_19 = arith.constant 0 : index
    %25 = vector.load %arg8[%c0_18, %c0_19] : memref<128x128xf32, #tpu.memory_space<vmem>>, vector<128x128xf32>
    tpu.vector_store %arg8[%c0_18, %c0_19], %24 {strides = array<i32>} : memref<128x128xf32, #tpu.memory_space<vmem>>, vector<128x128xf32>,
    return
  }
  func.func @transform_0(%arg0: i32) -> (i32, i32) {
    %c0_i32 = arith.constant 0 : i32
    %c0_i32_0 = arith.constant 0 : i32
    return %arg0, %c0_i32 : i32, i32
  }
  func.func @transform_1(%arg0: i32) -> (i32, i32) {
    %c0_i32 = arith.constant 0 : i32
    %c0_i32_0 = arith.constant 0 : i32
    %c0_i32_1 = arith.constant 0 : i32
    return %c0_i32, %c0_i32_0 : i32, i32
  }
  func.func @transform_2(%arg0: i32) -> (i32, i32) {
    %c0_i32 = arith.constant 0 : i32
    %c0_i32_0 = arith.constant 0 : i32
    %c0_i32_1 = arith.constant 0 : i32
    return %c0_i32, %c0_i32_0 : i32, i32
  }
  func.func @transform_3(%arg0: i32) -> (i32, i32) {
    %c0_i32 = arith.constant 0 : i32
    %c0_i32_0 = arith.constant 0 : i32
    %c0_i32_1 = arith.constant 0 : i32
    return %c0_i32, %c0_i32_0 : i32, i32
  }
  func.func @transform_4(%arg0: i32) -> (i32, i32) {
    %c0_i32 = arith.constant 0 : i32
    %c0_i32_0 = arith.constant 0 : i32
    %c0_i32_1 = arith.constant 0 : i32
    return %c0_i32, %c0_i32_0 : i32, i32
  }
  func.func @transform_5(%arg0: i32) -> (i32, i32) {
    %c0_i32 = arith.constant 0 : i32
    %c0_i32_0 = arith.constant 0 : i32
    %c0_i32_1 = arith.constant 0 : i32
    return %c0_i32, %c0_i32_0 : i32, i32
  }
  func.func @transform_6(%arg0: i32) -> (i32, i32) {
    %c0_i32 = arith.constant 0 : i32
    %c0_i32_0 = arith.constant 0 : i32
    %c0_i32_1 = arith.constant 0 : i32
    return %c0_i32, %c0_i32_0 : i32, i32
  }
  func.func @transform_7(%arg0: i32) -> (i32, i32) {
    %c0_i32 = arith.constant 0 : i32
    %c0_i32_0 = arith.constant 0 : i32
    return %arg0, %c0_i32 : i32, i32
  }
}

</mosaic_0001>

<llo_original>
// kernel: tpu_custom_call.1
$region0: #{tpu_custom_call.1}
  #allocation0 [shape = 'u32[]', space=smem, size = 0x4, offset = 0x4, fixed_abs, tag = 'smem constant byte address 0x4 - core index']
  #allocation1 [shape = 'u32[144,128]{1,0:T(1,128)}', space=vmem, size = 0x12000, scoped, tag = 'internal scratch']
  %s0 = inlined_call_operand.vmem [shape: f32[128,32], index: 0, kind: input, shape index: {}]
  %s1 = inlined_call_operand.vmem [shape: f32[32,128], index: 1, kind: input, shape index: {}]
  %s2 = inlined_call_operand.vmem [shape: f32[1,128], index: 2, kind: input, shape index: {}]
  %s3 = inlined_call_operand.vmem [shape: f32[128,128], index: 3, kind: input, shape index: {}]
  %s4 = inlined_call_operand.vmem [shape: f32[1,128], index: 4, kind: input, shape index: {}]
  %s5 = inlined_call_operand.hbm [shape: f32[128,128], index: 5, kind: input, shape index: {}]
  %s6 = inlined_call_operand.vmem [shape: f32[1,128], index: 6, kind: input, shape index: {}]
  %s7 = inlined_call_operand.hbm [shape: f32[128,128], index: 7, kind: output, shape index: {}]
  %s8 = sld [smem:[#allocation0]]
  $region42: #{tpu_custom_call.1} parent=0
    _
  %s10 = ssub.s32 1, %s8
  %s11 = scalar_select 0, %s10, %s8
  $region1: #{tpu_custom_call.1} parent=0
    #allocation2 [shape = 'u8[65536]{0}', space=vmem, size = 0x10000, scoped, tag = 'input window, operand 5, single buffered']
    #allocation3 [shape = 's32[1]{0}', space=sflag, size = 0x4, scoped, tag = 'scoped memory for tpu_custom_call.1']
    #allocation4 [shape = 's32[1]{0}', space=sflag, size = 0x4, scoped, tag = 'scoped memory for tpu_custom_call.1']
    #allocation5 [shape = 'u8[65536]{0}', space=vmem, size = 0x10000, scoped, tag = 'output window, operand 0, single buffered']
    %12 = vsyncpa [#allocation3], 0
    %13 = vsyncpa [#allocation4], 0
    // Predicated region
    $region2: #{tpu_custom_call.1} parent=1 // pred_check
      _
    $region3: #{tpu_custom_call.1} parent=1 // pred_check_branch
      %15 = sbr.rel (0) target = $region5
    $region4: #{tpu_custom_call.1} parent=1 // pred_region
      _
    $region5: #{tpu_custom_call.1} parent=1 // pred_fallthru
      _
    // Predicated region
    $region6: #{tpu_custom_call.1} parent=1 // pred_check
      _
    $region7: #{tpu_custom_call.1} parent=1 // pred_check_branch
      %17 = sbr.rel (0) target = $region9
    $region8: #{tpu_custom_call.1} parent=1 // pred_region
      _
    $region9: #{tpu_custom_call.1} parent=1 // pred_fallthru
      _
    // Predicated region
    $region10: #{tpu_custom_call.1} parent=1 // pred_check
      _
    $region11: #{tpu_custom_call.1} parent=1 // pred_check_branch
      %19 = sbr.rel (0) target = $region13
    $region12: #{tpu_custom_call.1} parent=1 // pred_region
      _
    $region13: #{tpu_custom_call.1} parent=1 // pred_fallthru
      _
    // Predicated region
    $region14: #{tpu_custom_call.1} parent=1 // pred_check
      _
    $region15: #{tpu_custom_call.1} parent=1 // pred_check_branch
      %21 = sbr.rel (0) target = $region17
    $region16: #{tpu_custom_call.1} parent=1 // pred_region
      _
    $region17: #{tpu_custom_call.1} parent=1 // pred_fallthru
      _
    // Predicated region
    $region18: #{tpu_custom_call.1} parent=1 // pred_check
      _
    $region19: #{tpu_custom_call.1} parent=1 // pred_check_branch
      %23 = sbr.rel (0) target = $region21
    $region20: #{tpu_custom_call.1} parent=1 // pred_region
      _
    $region21: #{tpu_custom_call.1} parent=1 // pred_fallthru
      _
    // Predicated region
    $region22: #{tpu_custom_call.1} parent=1 // pred_check
      _
    $region23: #{tpu_custom_call.1} parent=1 // pred_check_branch
      %25 = sbr.rel (0) target = $region25
    $region24: #{tpu_custom_call.1} parent=1 // pred_region
      %s27 = ssub.s32 2048, 2048
      %28 = vsyncadd [#allocation3], %s27
      %s29 = sshll.u32 [#allocation2], 4
      %s30 = int_to_ptr.vmem [resolvable:$true] %s29
      %35 = dma.hbm_to_vmem [thread:$0]  %s5, 2048, %s30, [#allocation3], 128, 128, 8
    $region25: #{tpu_custom_call.1} parent=1 // pred_fallthru
      _
    // Predicated region
    $region26: #{tpu_custom_call.1} parent=1 // pred_check
      _
    $region27: #{tpu_custom_call.1} parent=1 // pred_check_branch
      %37 = sbr.rel (0) target = $region29
    $region28: #{tpu_custom_call.1} parent=1 // pred_region
      _
    $region29: #{tpu_custom_call.1} parent=1 // pred_fallthru
      _
    // Predicated region
    $region30: #{tpu_custom_call.1} parent=1 // pred_check
      _
    $region31: #{tpu_custom_call.1} parent=1 // pred_check_branch
      %39 = sbr.rel (0) target = $region33
    $region32: #{tpu_custom_call.1} parent=1 // pred_region
      %40 = dma.done [#allocation3], 2048
    $region33: #{tpu_custom_call.1} parent=1 // pred_fallthru
      _
    %v41 = vld [vmem:[%s0] sm:$0xff]
    %v42 = vld [vmem:[%s0 + $0x8] sm:$0xff]
    %v43 = vld [vmem:[%s0 + $0x10] sm:$0xff]
    %v44 = vld [vmem:[%s0 + $0x18] sm:$0xff]
    %v45 = vld [vmem:[%s0 + $0x20] sm:$0xff]
    %v46 = vld [vmem:[%s0 + $0x28] sm:$0xff]
    %v47 = vld [vmem:[%s0 + $0x30] sm:$0xff]
    %v48 = vld [vmem:[%s0 + $0x38] sm:$0xff]
    %v49 = vld [vmem:[%s0 + $0x40] sm:$0xff]
    %v50 = vld [vmem:[%s0 + $0x48] sm:$0xff]
    %v51 = vld [vmem:[%s0 + $0x50] sm:$0xff]
    %v52 = vld [vmem:[%s0 + $0x58] sm:$0xff]
    %v53 = vld [vmem:[%s0 + $0x60] sm:$0xff]
    %v54 = vld [vmem:[%s0 + $0x68] sm:$0xff]
    %v55 = vld [vmem:[%s0 + $0x70] sm:$0xff]
    %v56 = vld [vmem:[%s0 + $0x78] sm:$0xff]
    %v57 = vld [vmem:[%s1] sm:$0xff]
    %v58 = vld [vmem:[%s1 + $0x8] sm:$0xff]
    %v59 = vld [vmem:[%s1 + $0x10] sm:$0xff]
    %v60 = vld [vmem:[%s1 + $0x18] sm:$0xff]
    %v61 = vld [vmem:[%s2] sm:$0x1]
    %v63 = vlaneseq
    %v64 = vshrl.u32 %v63, 7
    %v65 = vsub.s32 0, %v64
    %v66 = vrot.slane %v61, %v65
    %vm68 = vcmask 261120
    %v70 = vsel %vm68, %v41, 0
    %v73 = vsel %vm68, %v42, 0
    %v76 = vsel %vm68, %v43, 0
    %v79 = vsel %vm68, %v44, 0
    %v82 = vsel %vm68, %v45, 0
    %v85 = vsel %vm68, %v46, 0
    %v88 = vsel %vm68, %v47, 0
    %v91 = vsel %vm68, %v48, 0
    %v94 = vsel %vm68, %v49, 0
    %v97 = vsel %vm68, %v50, 0
    %v100 = vsel %vm68, %v51, 0
    %v103 = vsel %vm68, %v52, 0
    %v106 = vsel %vm68, %v53, 0
    %v109 = vsel %vm68, %v54, 0
    %v112 = vsel %vm68, %v55, 0
    %v115 = vsel %vm68, %v56, 0
    %117 = vmatprep.subr.mxu0 0.0
    %118 = vmatpush1.msra.mxu0 0.0
    %119 = vmatprep.subr.mxu0 0.0
    %120 = vmatpush1.msra.mxu0 0.0
    %121 = vmatprep.subr.mxu0 0.0
    %122 = vmatpush1.msra.mxu0 0.0
    %123 = vmatprep.subr.mxu0 0.0
    %124 = vmatpush1.msra.mxu0 0.0
    %125 = vmatprep.subr.mxu0 0.0
    %126 = vmatpush1.msra.mxu0 0.0
    %127 = vmatprep.subr.mxu0 0.0
    %128 = vmatpush1.msra.mxu0 0.0
    %129 = vmatprep.subr.mxu0 0.0
    %130 = vmatpush1.msra.mxu0 0.0
    %131 = vmatprep.subr.mxu0 0.0
    %132 = vmatpush1.msra.mxu0 0.0
    %133 = vmatprep.subr.mxu0 0.0
    %134 = vmatpush1.msra.mxu0 0.0
    %135 = vmatprep.subr.mxu0 0.0
    %136 = vmatpush1.msra.mxu0 0.0
    %137 = vmatprep.subr.mxu0 0.0
    %138 = vmatpush1.msra.mxu0 0.0
    %139 = vmatprep.subr.mxu0 0.0
    %140 = vmatpush1.msra.mxu0 0.0
    %141 = vmatprep.subr.mxu0 0.0
    %142 = vmatpush1.msra.mxu0 %v60
    %143 = vmatprep.subr.mxu0 0.0
    %144 = vmatpush1.msra.mxu0 %v59
    %145 = vmatprep.subr.mxu0 0.0
    %146 = vmatpush1.msra.mxu0 %v58
    %147 = vmatprep.subr.mxu0 0.0
    %148 = vmatpush1.msra.mxu0 %v57
    %149 = vmatprep.subr.mxu0 0.0
    %150 = vmatpush2.msra.mxu0 0.0
    %151 = vmatprep.subr.mxu0 0.0
    %152 = vmatpush2.msra.mxu0 0.0
    %153 = vmatprep.subr.mxu0 0.0
    %154 = vmatpush2.msra.mxu0 0.0
    %155 = vmatprep.subr.mxu0 0.0
    %156 = vmatpush2.msra.mxu0 0.0
    %157 = vmatprep.subr.mxu0 0.0
    %158 = vmatpush2.msra.mxu0 0.0
    %159 = vmatprep.subr.mxu0 0.0
    %160 = vmatpush2.msra.mxu0 0.0
    %161 = vmatprep.subr.mxu0 0.0
    %162 = vmatpush2.msra.mxu0 0.0
    %163 = vmatprep.subr.mxu0 0.0
    %164 = vmatpush2.msra.mxu0 0.0
    %165 = vmatprep.subr.mxu0 0.0
    %166 = vmatpush2.msra.mxu0 0.0
    %167 = vmatprep.subr.mxu0 0.0
    %168 = vmatpush2.msra.mxu0 0.0
    %169 = vmatprep.subr.mxu0 0.0
    %170 = vmatpush2.msra.mxu0 0.0
    %171 = vmatprep.subr.mxu0 0.0
    %172 = vmatpush2.msra.mxu0 0.0
    %173 = vmatprep.subr.mxu0 0.0
    %174 = vmatpush2.msra.mxu0 0.0
    %175 = vmatprep.subr.mxu0 0.0
    %176 = vmatpush2.msra.mxu0 0.0
    %177 = vmatprep.subr.mxu0 0.0
    %178 = vmatpush2.msra.mxu0 0.0
    %179 = vmatprep.subr.mxu0 0.0
    %180 = vmatpush2.msra.mxu0 0.0
    %181 = vmatprep.mubr.f32.mxu0 0.0
    %182 = vmatmul.mubr.f32.gmra.mxu0 %v70
    %v183 = vpop.f32.mrf.mxu0
    %v184 = vadd.f32 %v66, %v183
    %v185 = vpop.f32.mrf.mxu0
    %186 = vmatprep.mubr.f32.mxu0 0.0
    %187 = vmatmul.mubr.f32.gmra.mxu0 %v73
    %v188 = vpop.f32.mrf.mxu0
    %v189 = vadd.f32 %v66, %v188
    %v190 = vpop.f32.mrf.mxu0
    %191 = vmatprep.mubr.f32.mxu0 0.0
    %192 = vmatmul.mubr.f32.gmra.mxu0 %v76
    %v193 = vpop.f32.mrf.mxu0
    %v194 = vadd.f32 %v66, %v193
    %v195 = vpop.f32.mrf.mxu0
    %196 = vmatprep.mubr.f32.mxu0 0.0
    %197 = vmatmul.mubr.f32.gmra.mxu0 %v79
    %v198 = vpop.f32.mrf.mxu0
    %v199 = vadd.f32 %v66, %v198
    %v200 = vpop.f32.mrf.mxu0
    %201 = vmatprep.mubr.f32.mxu0 0.0
    %202 = vmatmul.mubr.f32.gmra.mxu0 %v82
    %v203 = vpop.f32.mrf.mxu0
    %v204 = vadd.f32 %v66, %v203
    %v205 = vpop.f32.mrf.mxu0
    %206 = vmatprep.mubr.f32.mxu0 0.0
    %207 = vmatmul.mubr.f32.gmra.mxu0 %v85
    %v208 = vpop.f32.mrf.mxu0
    %v209 = vadd.f32 %v66, %v208
    %v210 = vpop.f32.mrf.mxu0
    %211 = vmatprep.mubr.f32.mxu0 0.0
    %212 = vmatmul.mubr.f32.gmra.mxu0 %v88
    %v213 = vpop.f32.mrf.mxu0
    %v214 = vadd.f32 %v66, %v213
    %v215 = vpop.f32.mrf.mxu0
    %216 = vmatprep.mubr.f32.mxu0 0.0
    %217 = vmatmul.mubr.f32.gmra.mxu0 %v91
    %v218 = vpop.f32.mrf.mxu0
    %v219 = vadd.f32 %v66, %v218
    %v220 = vpop.f32.mrf.mxu0
    %221 = vmatprep.mubr.f32.mxu0 0.0
    %222 = vmatmul.mubr.f32.gmra.mxu0 %v94
    %v223 = vpop.f32.mrf.mxu0
    %v224 = vadd.f32 %v66, %v223
    %v225 = vpop.f32.mrf.mxu0
    %226 = vmatprep.mubr.f32.mxu0 0.0
    %227 = vmatmul.mubr.f32.gmra.mxu0 %v97
    %v228 = vpop.f32.mrf.mxu0
    %v229 = vadd.f32 %v66, %v228
    %v230 = vpop.f32.mrf.mxu0
    %231 = vmatprep.mubr.f32.mxu0 0.0
    %232 = vmatmul.mubr.f32.gmra.mxu0 %v100
    %v233 = vpop.f32.mrf.mxu0
    %v234 = vadd.f32 %v66, %v233
    %v235 = vpop.f32.mrf.mxu0
    %236 = vmatprep.mubr.f32.mxu0 0.0
    %237 = vmatmul.mubr.f32.gmra.mxu0 %v103
    %v238 = vpop.f32.mrf.mxu0
    %v239 = vadd.f32 %v66, %v238
    %v240 = vpop.f32.mrf.mxu0
    %241 = vmatprep.mubr.f32.mxu0 0.0
    %242 = vmatmul.mubr.f32.gmra.mxu0 %v106
    %v243 = vpop.f32.mrf.mxu0
    %v244 = vadd.f32 %v66, %v243
    %v245 = vpop.f32.mrf.mxu0
    %246 = vmatprep.mubr.f32.mxu0 0.0
    %247 = vmatmul.mubr.f32.gmra.mxu0 %v109
    %v248 = vpop.f32.mrf.mxu0
    %v249 = vadd.f32 %v66, %v248
    %v250 = vpop.f32.mrf.mxu0
    %251 = vmatprep.mubr.f32.mxu0 0.0
    %252 = vmatmul.mubr.f32.gmra.mxu0 %v112
    %v253 = vpop.f32.mrf.mxu0
    %v254 = vadd.f32 %v66, %v253
    %v255 = vpop.f32.mrf.mxu0
    %256 = vmatprep.mubr.f32.mxu0 0.0
    %257 = vmatmul.mubr.f32.gmra.mxu0 %v115
    %v258 = vpop.f32.mrf.mxu0
    %v259 = vadd.f32 %v66, %v258
    %v260 = vpop.f32.mrf.mxu0
    %261 = vdwg.mxu0
    %v262 = vmax.f32 %v184, 0.0
    %v263 = vmax.f32 %v189, 0.0
    %v264 = vmax.f32 %v194, 0.0
    %v265 = vmax.f32 %v199, 0.0
    %v266 = vmax.f32 %v204, 0.0
    %v267 = vmax.f32 %v209, 0.0
    %v268 = vmax.f32 %v214, 0.0
    %v269 = vmax.f32 %v219, 0.0
    %v270 = vmax.f32 %v224, 0.0
    %v271 = vmax.f32 %v229, 0.0
    %v272 = vmax.f32 %v234, 0.0
    %v273 = vmax.f32 %v239, 0.0
    %v274 = vmax.f32 %v244, 0.0
    %v275 = vmax.f32 %v249, 0.0
    %v276 = vmax.f32 %v254, 0.0
    %v277 = vmax.f32 %v259, 0.0
    %v278 = vld [vmem:[%s3] sm:$0xff]
    %v279 = vld [vmem:[%s3 + $0x8] sm:$0xff]
    %v280 = vld [vmem:[%s3 + $0x10] sm:$0xff]
    %v281 = vld [vmem:[%s3 + $0x18] sm:$0xff]
    %v282 = vld [vmem:[%s3 + $0x20] sm:$0xff]
    %v283 = vld [vmem:[%s3 + $0x28] sm:$0xff]
    %v284 = vld [vmem:[%s3 + $0x30] sm:$0xff]
    %v285 = vld [vmem:[%s3 + $0x38] sm:$0xff]
    %v286 = vld [vmem:[%s3 + $0x40] sm:$0xff]
    %v287 = vld [vmem:[%s3 + $0x48] sm:$0xff]
    %v288 = vld [vmem:[%s3 + $0x50] sm:$0xff]
    %v289 = vld [vmem:[%s3 + $0x58] sm:$0xff]
    %v290 = vld [vmem:[%s3 + $0x60] sm:$0xff]
    %v291 = vld [vmem:[%s3 + $0x68] sm:$0xff]
    %v292 = vld [vmem:[%s3 + $0x70] sm:$0xff]
    %v293 = vld [vmem:[%s3 + $0x78] sm:$0xff]
    %v294 = vld [vmem:[%s4] sm:$0x1]
    %v296 = vlaneseq
    %v297 = vshrl.u32 %v296, 7
    %v298 = vsub.s32 0, %v297
    %v299 = vrot.slane %v294, %v298
    %301 = vmatprep.subr.mxu0 0.0
    %302 = vmatpush1.msra.mxu0 %v293
    %303 = vmatprep.subr.mxu0 0.0
    %304 = vmatpush1.msra.mxu0 %v292
    %305 = vmatprep.subr.mxu0 0.0
    %306 = vmatpush1.msra.mxu0 %v291
    %307 = vmatprep.subr.mxu0 0.0
    %308 = vmatpush1.msra.mxu0 %v290
    %309 = vmatprep.subr.mxu0 0.0
    %310 = vmatpush1.msra.mxu0 %v289
    %311 = vmatprep.subr.mxu0 0.0
    %312 = vmatpush1.msra.mxu0 %v288
    %313 = vmatprep.subr.mxu0 0.0
    %314 = vmatpush1.msra.mxu0 %v287
    %315 = vmatprep.subr.mxu0 0.0
    %316 = vmatpush1.msra.mxu0 %v286
    %317 = vmatprep.subr.mxu0 0.0
    %318 = vmatpush1.msra.mxu0 %v285
    %319 = vmatprep.subr.mxu0 0.0
    %320 = vmatpush1.msra.mxu0 %v284
    %321 = vmatprep.subr.mxu0 0.0
    %322 = vmatpush1.msra.mxu0 %v283
    %323 = vmatprep.subr.mxu0 0.0
    %324 = vmatpush1.msra.mxu0 %v282
    %325 = vmatprep.subr.mxu0 0.0
    %326 = vmatpush1.msra.mxu0 %v281
    %327 = vmatprep.subr.mxu0 0.0
    %328 = vmatpush1.msra.mxu0 %v280
    %329 = vmatprep.subr.mxu0 0.0
    %330 = vmatpush1.msra.mxu0 %v279
    %331 = vmatprep.subr.mxu0 0.0
    %332 = vmatpush1.msra.mxu0 %v278
    %333 = vmatprep.subr.mxu0 0.0
    %334 = vmatpush2.msra.mxu0 0.0
    %335 = vmatprep.subr.mxu0 0.0
    %336 = vmatpush2.msra.mxu0 0.0
    %337 = vmatprep.subr.mxu0 0.0
    %338 = vmatpush2.msra.mxu0 0.0
    %339 = vmatprep.subr.mxu0 0.0
    %340 = vmatpush2.msra.mxu0 0.0
    %341 = vmatprep.subr.mxu0 0.0
    %342 = vmatpush2.msra.mxu0 0.0
    %343 = vmatprep.subr.mxu0 0.0
    %344 = vmatpush2.msra.mxu0 0.0
    %345 = vmatprep.subr.mxu0 0.0
    %346 = vmatpush2.msra.mxu0 0.0
    %347 = vmatprep.subr.mxu0 0.0
    %348 = vmatpush2.msra.mxu0 0.0
    %349 = vmatprep.subr.mxu0 0.0
    %350 = vmatpush2.msra.mxu0 0.0
    %351 = vmatprep.subr.mxu0 0.0
    %352 = vmatpush2.msra.mxu0 0.0
    %353 = vmatprep.subr.mxu0 0.0
    %354 = vmatpush2.msra.mxu0 0.0
    %355 = vmatprep.subr.mxu0 0.0
    %356 = vmatpush2.msra.mxu0 0.0
    %357 = vmatprep.subr.mxu0 0.0
    %358 = vmatpush2.msra.mxu0 0.0
    %359 = vmatprep.subr.mxu0 0.0
    %360 = vmatpush2.msra.mxu0 0.0
    %361 = vmatprep.subr.mxu0 0.0
    %362 = vmatpush2.msra.mxu0 0.0
    %363 = vmatprep.subr.mxu0 0.0
    %364 = vmatpush2.msra.mxu0 0.0
    %365 = vmatprep.mubr.f32.mxu0 0.0
    %366 = vmatmul.mubr.f32.gmra.mxu0 %v262
    %v367 = vpop.f32.mrf.mxu0
    %v368 = vadd.f32 %v299, %v367
    %v369 = vpop.f32.mrf.mxu0
    %370 = vmatprep.mubr.f32.mxu0 0.0
    %371 = vmatmul.mubr.f32.gmra.mxu0 %v263
    %v372 = vpop.f32.mrf.mxu0
    %v373 = vadd.f32 %v299, %v372
    %v374 = vpop.f32.mrf.mxu0
    %375 = vmatprep.mubr.f32.mxu0 0.0
    %376 = vmatmul.mubr.f32.gmra.mxu0 %v264
    %v377 = vpop.f32.mrf.mxu0
    %v378 = vadd.f32 %v299, %v377
    %v379 = vpop.f32.mrf.mxu0
    %380 = vmatprep.mubr.f32.mxu0 0.0
    %381 = vmatmul.mubr.f32.gmra.mxu0 %v265
    %v382 = vpop.f32.mrf.mxu0
    %v383 = vadd.f32 %v299, %v382
    %v384 = vpop.f32.mrf.mxu0
    %385 = vmatprep.mubr.f32.mxu0 0.0
    %386 = vmatmul.mubr.f32.gmra.mxu0 %v266
    %v387 = vpop.f32.mrf.mxu0
    %v388 = vadd.f32 %v299, %v387
    %v389 = vpop.f32.mrf.mxu0
    %390 = vmatprep.mubr.f32.mxu0 0.0
    %391 = vmatmul.mubr.f32.gmra.mxu0 %v267
    %v392 = vpop.f32.mrf.mxu0
    %v393 = vadd.f32 %v299, %v392
    %v394 = vpop.f32.mrf.mxu0
    %395 = vmatprep.mubr.f32.mxu0 0.0
    %396 = vmatmul.mubr.f32.gmra.mxu0 %v268
    %v397 = vpop.f32.mrf.mxu0
    %v398 = vadd.f32 %v299, %v397
    %v399 = vpop.f32.mrf.mxu0
    %400 = vmatprep.mubr.f32.mxu0 0.0
    %401 = vmatmul.mubr.f32.gmra.mxu0 %v269
    %v402 = vpop.f32.mrf.mxu0
    %v403 = vadd.f32 %v299, %v402
    %v404 = vpop.f32.mrf.mxu0
    %405 = vmatprep.mubr.f32.mxu0 0.0
    %406 = vmatmul.mubr.f32.gmra.mxu0 %v270
    %v407 = vpop.f32.mrf.mxu0
    %v408 = vadd.f32 %v299, %v407
    %v409 = vpop.f32.mrf.mxu0
    %410 = vmatprep.mubr.f32.mxu0 0.0
    %411 = vmatmul.mubr.f32.gmra.mxu0 %v271
    %v412 = vpop.f32.mrf.mxu0
    %v413 = vadd.f32 %v299, %v412
    %v414 = vpop.f32.mrf.mxu0
    %415 = vmatprep.mubr.f32.mxu0 0.0
    %416 = vmatmul.mubr.f32.gmra.mxu0 %v272
    %v417 = vpop.f32.mrf.mxu0
    %v418 = vadd.f32 %v299, %v417
    %v419 = vpop.f32.mrf.mxu0
    %420 = vmatprep.mubr.f32.mxu0 0.0
    %421 = vmatmul.mubr.f32.gmra.mxu0 %v273
    %v422 = vpop.f32.mrf.mxu0
    %v423 = vadd.f32 %v299, %v422
    %v424 = vpop.f32.mrf.mxu0
    %425 = vmatprep.mubr.f32.mxu0 0.0
    %426 = vmatmul.mubr.f32.gmra.mxu0 %v274
    %v427 = vpop.f32.mrf.mxu0
    %v428 = vadd.f32 %v299, %v427
    %v429 = vpop.f32.mrf.mxu0
    %430 = vmatprep.mubr.f32.mxu0 0.0
    %431 = vmatmul.mubr.f32.gmra.mxu0 %v275
    %v432 = vpop.f32.mrf.mxu0
    %v433 = vadd.f32 %v299, %v432
    %v434 = vpop.f32.mrf.mxu0
    %435 = vmatprep.mubr.f32.mxu0 0.0
    %436 = vmatmul.mubr.f32.gmra.mxu0 %v276
    %v437 = vpop.f32.mrf.mxu0
    %v438 = vadd.f32 %v299, %v437
    %v439 = vpop.f32.mrf.mxu0
    %440 = vmatprep.mubr.f32.mxu0 0.0
    %441 = vmatmul.mubr.f32.gmra.mxu0 %v277
    %v442 = vpop.f32.mrf.mxu0
    %v443 = vadd.f32 %v299, %v442
    %v444 = vpop.f32.mrf.mxu0
    %445 = vdwg.mxu0
    %v446 = vmax.f32 %v368, 0.0
    %v447 = vmax.f32 %v373, 0.0
    %v448 = vmax.f32 %v378, 0.0
    %v449 = vmax.f32 %v383, 0.0
    %v450 = vmax.f32 %v388, 0.0
    %v451 = vmax.f32 %v393, 0.0
    %v452 = vmax.f32 %v398, 0.0
    %v453 = vmax.f32 %v403, 0.0
    %v454 = vmax.f32 %v408, 0.0
    %v455 = vmax.f32 %v413, 0.0
    %v456 = vmax.f32 %v418, 0.0
    %v457 = vmax.f32 %v423, 0.0
    %v458 = vmax.f32 %v428, 0.0
    %v459 = vmax.f32 %v433, 0.0
    %v460 = vmax.f32 %v438, 0.0
    %v461 = vmax.f32 %v443, 0.0
    %v462 = vld [vmem:[#allocation2] sm:$0xff]
    %v463 = vld [vmem:[#allocation2 + $0x8] sm:$0xff]
    %v464 = vld [vmem:[#allocation2 + $0x10] sm:$0xff]
    %v465 = vld [vmem:[#allocation2 + $0x18] sm:$0xff]
    %v466 = vld [vmem:[#allocation2 + $0x20] sm:$0xff]
    %v467 = vld [vmem:[#allocation2 + $0x28] sm:$0xff]
    %v468 = vld [vmem:[#allocation2 + $0x30] sm:$0xff]
    %v469 = vld [vmem:[#allocation2 + $0x38] sm:$0xff]
    %v470 = vld [vmem:[#allocation2 + $0x40] sm:$0xff]
    %v471 = vld [vmem:[#allocation2 + $0x48] sm:$0xff]
    %v472 = vld [vmem:[#allocation2 + $0x50] sm:$0xff]
    %v473 = vld [vmem:[#allocation2 + $0x58] sm:$0xff]
    %v474 = vld [vmem:[#allocation2 + $0x60] sm:$0xff]
    %v475 = vld [vmem:[#allocation2 + $0x68] sm:$0xff]
    %v476 = vld [vmem:[#allocation2 + $0x70] sm:$0xff]
    %v477 = vld [vmem:[#allocation2 + $0x78] sm:$0xff]
    %v478 = vld [vmem:[%s6] sm:$0x1]
    %v480 = vlaneseq
    %v481 = vshrl.u32 %v480, 7
    %v482 = vsub.s32 0, %v481
    %v483 = vrot.slane %v478, %v482
    %485 = vmatprep.subr.mxu0 0.0
    %486 = vmatpush1.msra.mxu0 %v477
    %487 = vmatprep.subr.mxu0 0.0
    %488 = vmatpush1.msra.mxu0 %v476
    %489 = vmatprep.subr.mxu0 0.0
    %490 = vmatpush1.msra.mxu0 %v475
    %491 = vmatprep.subr.mxu0 0.0
    %492 = vmatpush1.msra.mxu0 %v474
    %493 = vmatprep.subr.mxu0 0.0
    %494 = vmatpush1.msra.mxu0 %v473
    %495 = vmatprep.subr.mxu0 0.0
    %496 = vmatpush1.msra.mxu0 %v472
    %497 = vmatprep.subr.mxu0 0.0
    %498 = vmatpush1.msra.mxu0 %v471
    %499 = vmatprep.subr.mxu0 0.0
    %500 = vmatpush1.msra.mxu0 %v470
    %501 = vmatprep.subr.mxu0 0.0
    %502 = vmatpush1.msra.mxu0 %v469
    %503 = vmatprep.subr.mxu0 0.0
    %504 = vmatpush1.msra.mxu0 %v468
    %505 = vmatprep.subr.mxu0 0.0
    %506 = vmatpush1.msra.mxu0 %v467
    %507 = vmatprep.subr.mxu0 0.0
    %508 = vmatpush1.msra.mxu0 %v466
    %509 = vmatprep.subr.mxu0 0.0
    %510 = vmatpush1.msra.mxu0 %v465
    %511 = vmatprep.subr.mxu0 0.0
    %512 = vmatpush1.msra.mxu0 %v464
    %513 = vmatprep.subr.mxu0 0.0
    %514 = vmatpush1.msra.mxu0 %v463
    %515 = vmatprep.subr.mxu0 0.0
    %516 = vmatpush1.msra.mxu0 %v462
    %517 = vmatprep.subr.mxu0 0.0
    %518 = vmatpush2.msra.mxu0 0.0
    %519 = vmatprep.subr.mxu0 0.0
    %520 = vmatpush2.msra.mxu0 0.0
    %521 = vmatprep.subr.mxu0 0.0
    %522 = vmatpush2.msra.mxu0 0.0
    %523 = vmatprep.subr.mxu0 0.0
    %524 = vmatpush2.msra.mxu0 0.0
    %525 = vmatprep.subr.mxu0 0.0
    %526 = vmatpush2.msra.mxu0 0.0
    %527 = vmatprep.subr.mxu0 0.0
    %528 = vmatpush2.msra.mxu0 0.0
    %529 = vmatprep.subr.mxu0 0.0
    %530 = vmatpush2.msra.mxu0 0.0
    %531 = vmatprep.subr.mxu0 0.0
    %532 = vmatpush2.msra.mxu0 0.0
    %533 = vmatprep.subr.mxu0 0.0
    %534 = vmatpush2.msra.mxu0 0.0
    %535 = vmatprep.subr.mxu0 0.0
    %536 = vmatpush2.msra.mxu0 0.0
    %537 = vmatprep.subr.mxu0 0.0
    %538 = vmatpush2.msra.mxu0 0.0
    %539 = vmatprep.subr.mxu0 0.0
    %540 = vmatpush2.msra.mxu0 0.0
    %541 = vmatprep.subr.mxu0 0.0
    %542 = vmatpush2.msra.mxu0 0.0
    %543 = vmatprep.subr.mxu0 0.0
    %544 = vmatpush2.msra.mxu0 0.0
    %545 = vmatprep.subr.mxu0 0.0
    %546 = vmatpush2.msra.mxu0 0.0
    %547 = vmatprep.subr.mxu0 0.0
    %548 = vmatpush2.msra.mxu0 0.0
    %549 = vmatprep.mubr.f32.mxu0 0.0
    %550 = vmatmul.mubr.f32.gmra.mxu0 %v446
    %v551 = vpop.f32.mrf.mxu0
    %v552 = vadd.f32 %v483, %v551
    %v553 = vpop.f32.mrf.mxu0
    %554 = vmatprep.mubr.f32.mxu0 0.0
    %555 = vmatmul.mubr.f32.gmra.mxu0 %v447
    %v556 = vpop.f32.mrf.mxu0
    %v557 = vadd.f32 %v483, %v556
    %v558 = vpop.f32.mrf.mxu0
    %559 = vmatprep.mubr.f32.mxu0 0.0
    %560 = vmatmul.mubr.f32.gmra.mxu0 %v448
    %v561 = vpop.f32.mrf.mxu0
    %v562 = vadd.f32 %v483, %v561
    %v563 = vpop.f32.mrf.mxu0
    %564 = vmatprep.mubr.f32.mxu0 0.0
    %565 = vmatmul.mubr.f32.gmra.mxu0 %v449
    %v566 = vpop.f32.mrf.mxu0
    %v567 = vadd.f32 %v483, %v566
    %v568 = vpop.f32.mrf.mxu0
    %569 = vmatprep.mubr.f32.mxu0 0.0
    %570 = vmatmul.mubr.f32.gmra.mxu0 %v450
    %v571 = vpop.f32.mrf.mxu0
    %v572 = vadd.f32 %v483, %v571
    %v573 = vpop.f32.mrf.mxu0
    %574 = vmatprep.mubr.f32.mxu0 0.0
    %575 = vmatmul.mubr.f32.gmra.mxu0 %v451
    %v576 = vpop.f32.mrf.mxu0
    %v577 = vadd.f32 %v483, %v576
    %v578 = vpop.f32.mrf.mxu0
    %579 = vmatprep.mubr.f32.mxu0 0.0
    %580 = vmatmul.mubr.f32.gmra.mxu0 %v452
    %v581 = vpop.f32.mrf.mxu0
    %v582 = vadd.f32 %v483, %v581
    %v583 = vpop.f32.mrf.mxu0
    %584 = vmatprep.mubr.f32.mxu0 0.0
    %585 = vmatmul.mubr.f32.gmra.mxu0 %v453
    %v586 = vpop.f32.mrf.mxu0
    %v587 = vadd.f32 %v483, %v586
    %v588 = vpop.f32.mrf.mxu0
    %589 = vmatprep.mubr.f32.mxu0 0.0
    %590 = vmatmul.mubr.f32.gmra.mxu0 %v454
    %v591 = vpop.f32.mrf.mxu0
    %v592 = vadd.f32 %v483, %v591
    %v593 = vpop.f32.mrf.mxu0
    %594 = vmatprep.mubr.f32.mxu0 0.0
    %595 = vmatmul.mubr.f32.gmra.mxu0 %v455
    %v596 = vpop.f32.mrf.mxu0
    %v597 = vadd.f32 %v483, %v596
    %v598 = vpop.f32.mrf.mxu0
    %599 = vmatprep.mubr.f32.mxu0 0.0
    %600 = vmatmul.mubr.f32.gmra.mxu0 %v456
    %v601 = vpop.f32.mrf.mxu0
    %v602 = vadd.f32 %v483, %v601
    %v603 = vpop.f32.mrf.mxu0
    %604 = vmatprep.mubr.f32.mxu0 0.0
    %605 = vmatmul.mubr.f32.gmra.mxu0 %v457
    %v606 = vpop.f32.mrf.mxu0
    %v607 = vadd.f32 %v483, %v606
    %v608 = vpop.f32.mrf.mxu0
    %609 = vmatprep.mubr.f32.mxu0 0.0
    %610 = vmatmul.mubr.f32.gmra.mxu0 %v458
    %v611 = vpop.f32.mrf.mxu0
    %v612 = vadd.f32 %v483, %v611
    %v613 = vpop.f32.mrf.mxu0
    %614 = vmatprep.mubr.f32.mxu0 0.0
    %615 = vmatmul.mubr.f32.gmra.mxu0 %v459
    %v616 = vpop.f32.mrf.mxu0
    %v617 = vadd.f32 %v483, %v616
    %v618 = vpop.f32.mrf.mxu0
    %619 = vmatprep.mubr.f32.mxu0 0.0
    %620 = vmatmul.mubr.f32.gmra.mxu0 %v460
    %v621 = vpop.f32.mrf.mxu0
    %v622 = vadd.f32 %v483, %v621
    %v623 = vpop.f32.mrf.mxu0
    %624 = vmatprep.mubr.f32.mxu0 0.0
    %625 = vmatmul.mubr.f32.gmra.mxu0 %v461
    %v626 = vpop.f32.mrf.mxu0
    %v627 = vadd.f32 %v483, %v626
    %v628 = vpop.f32.mrf.mxu0
    %629 = vdwg.mxu0
    %v630 = vxor.u32 %v552, 2147483648
    %v631 = vxor.u32 %v557, 2147483648
    %v632 = vxor.u32 %v562, 2147483648
    %v633 = vxor.u32 %v567, 2147483648
    %v634 = vxor.u32 %v572, 2147483648
    %v635 = vxor.u32 %v577, 2147483648
    %v636 = vxor.u32 %v582, 2147483648
    %v637 = vxor.u32 %v587, 2147483648
    %v638 = vxor.u32 %v592, 2147483648
    %v639 = vxor.u32 %v597, 2147483648
    %v640 = vxor.u32 %v602, 2147483648
    %v641 = vxor.u32 %v607, 2147483648
    %v642 = vxor.u32 %v612, 2147483648
    %v643 = vxor.u32 %v617, 2147483648
    %v644 = vxor.u32 %v622, 2147483648
    %v645 = vxor.u32 %v627, 2147483648
    %v646 = vmul.f32 %v630, 1.442695
    %v647 = vpow.pop %v646
    %v648 = vmul.f32 %v631, 1.442695
    %v649 = vpow.pop %v648
    %v650 = vmul.f32 %v632, 1.442695
    %v651 = vpow.pop %v650
    %v652 = vmul.f32 %v633, 1.442695
    %v653 = vpow.pop %v652
    %v654 = vmul.f32 %v634, 1.442695
    %v655 = vpow.pop %v654
    %v656 = vmul.f32 %v635, 1.442695
    %v657 = vpow.pop %v656
    %v658 = vmul.f32 %v636, 1.442695
    %v659 = vpow.pop %v658
    %v660 = vmul.f32 %v637, 1.442695
    %v661 = vpow.pop %v660
    %v662 = vmul.f32 %v638, 1.442695
    %v663 = vpow.pop %v662
    %v664 = vmul.f32 %v639, 1.442695
    %v665 = vpow.pop %v664
    %v666 = vmul.f32 %v640, 1.442695
    %v667 = vpow.pop %v666
    %v668 = vmul.f32 %v641, 1.442695
    %v669 = vpow.pop %v668
    %v670 = vmul.f32 %v642, 1.442695
    %v671 = vpow.pop %v670
    %v672 = vmul.f32 %v643, 1.442695
    %v673 = vpow.pop %v672
    %v674 = vmul.f32 %v644, 1.442695
    %v675 = vpow.pop %v674
    %v676 = vmul.f32 %v645, 1.442695
    %v677 = vpow.pop %v676
    %v678 = vadd.f32 %v647, 1.0
    %v679 = vadd.f32 %v649, 1.0
    %v680 = vadd.f32 %v651, 1.0
    %v681 = vadd.f32 %v653, 1.0
    %v682 = vadd.f32 %v655, 1.0
    %v683 = vadd.f32 %v657, 1.0
    %v684 = vadd.f32 %v659, 1.0
    %v685 = vadd.f32 %v661, 1.0
    %v686 = vadd.f32 %v663, 1.0
    %v687 = vadd.f32 %v665, 1.0
    %v688 = vadd.f32 %v667, 1.0
    %v689 = vadd.f32 %v669, 1.0
    %v690 = vadd.f32 %v671, 1.0
    %v691 = vadd.f32 %v673, 1.0
    %v692 = vadd.f32 %v675, 1.0
    %v693 = vadd.f32 %v677, 1.0
    %v694 = vrcp.pop %v678
    %v695 = vmul.f32 1.0, %v694
    %v696 = vrcp.pop %v679
    %v697 = vmul.f32 1.0, %v696
    %v698 = vrcp.pop %v680
    %v699 = vmul.f32 1.0, %v698
    %v700 = vrcp.pop %v681
    %v701 = vmul.f32 1.0, %v700
    %v702 = vrcp.pop %v682
    %v703 = vmul.f32 1.0, %v702
    %v704 = vrcp.pop %v683
    %v705 = vmul.f32 1.0, %v704
    %v706 = vrcp.pop %v684
    %v707 = vmul.f32 1.0, %v706
    %v708 = vrcp.pop %v685
    %v709 = vmul.f32 1.0, %v708
    %v710 = vrcp.pop %v686
    %v711 = vmul.f32 1.0, %v710
    %v712 = vrcp.pop %v687
    %v713 = vmul.f32 1.0, %v712
    %v714 = vrcp.pop %v688
    %v715 = vmul.f32 1.0, %v714
    %v716 = vrcp.pop %v689
    %v717 = vmul.f32 1.0, %v716
    %v718 = vrcp.pop %v690
    %v719 = vmul.f32 1.0, %v718
    %v720 = vrcp.pop %v691
    %v721 = vmul.f32 1.0, %v720
    %v722 = vrcp.pop %v692
    %v723 = vmul.f32 1.0, %v722
    %v724 = vrcp.pop %v693
    %v725 = vmul.f32 1.0, %v724
    %726 = vst [vmem:[#allocation5] sm:$0xff] %v695
    %727 = vst [vmem:[#allocation5 + $0x8] sm:$0xff] %v697
    %728 = vst [vmem:[#allocation5 + $0x10] sm:$0xff] %v699
    %729 = vst [vmem:[#allocation5 + $0x18] sm:$0xff] %v701
    %730 = vst [vmem:[#allocation5 + $0x20] sm:$0xff] %v703
    %731 = vst [vmem:[#allocation5 + $0x28] sm:$0xff] %v705
    %732 = vst [vmem:[#allocation5 + $0x30] sm:$0xff] %v707
    %733 = vst [vmem:[#allocation5 + $0x38] sm:$0xff] %v709
    %734 = vst [vmem:[#allocation5 + $0x40] sm:$0xff] %v711
    %735 = vst [vmem:[#allocation5 + $0x48] sm:$0xff] %v713
    %736 = vst [vmem:[#allocation5 + $0x50] sm:$0xff] %v715
    %737 = vst [vmem:[#allocation5 + $0x58] sm:$0xff] %v717
    %738 = vst [vmem:[#allocation5 + $0x60] sm:$0xff] %v719
    %739 = vst [vmem:[#allocation5 + $0x68] sm:$0xff] %v721
    %740 = vst [vmem:[#allocation5 + $0x70] sm:$0xff] %v723
    %741 = vst [vmem:[#allocation5 + $0x78] sm:$0xff] %v725
    // Predicated region
    $region34: #{tpu_custom_call.1} parent=1 // pred_check
      _
    $region35: #{tpu_custom_call.1} parent=1 // pred_check_branch
      %743 = sbr.rel (0) target = $region37
    $region36: #{tpu_custom_call.1} parent=1 // pred_region
      %s745 = ssub.s32 2048, 2048
      %746 = vsyncadd [#allocation4], %s745
      %s747 = sshll.u32 [#allocation5], 4
      %s748 = int_to_ptr.vmem [resolvable:$true] %s747
      %753 = dma.vmem_to_hbm [thread:$0]  %s748, 2048, %s7, [#allocation4], 128, 128, 8
    $region37: #{tpu_custom_call.1} parent=1 // pred_fallthru
      _
    // Predicated region
    $region38: #{tpu_custom_call.1} parent=1 // pred_check
      _
    $region39: #{tpu_custom_call.1} parent=1 // pred_check_branch
      %755 = sbr.rel (0) target = $region41
    $region40: #{tpu_custom_call.1} parent=1 // pred_region
      %756 = dma.done [#allocation4], 2048
    $region41: #{tpu_custom_call.1} parent=1 // pred_fallthru
      _
    %757 = vsyncpa [#allocation3], 1
    %758 = vsyncpa [#allocation4], 1

</llo_original>
